<compile_context>
chip_gen: v6e
topology: v6e:2x2x1
jax: 0.10.0
libtpu: 0.0.40
codegen_flags: <defaults>
</compile_context>

<pallas_src>
import functools

import jax
import jax.numpy as jnp
from jax import lax
from jax.experimental import pallas as pl
from jax.experimental.pallas import tpu as pltpu

HIDDEN = 512
LEAKY_SLOPE = 0.2


def _leaky_relu(x):
    # max(x, 0.2*x): vmul + vmax (2 VALU ops/elem) vs where-form's cmp+sel+mul (3).
    return jnp.maximum(x, x * LEAKY_SLOPE)


def _default_act_dtype():
    """bf16 activations where the VPU supports packed bf16 (v6e/v7x); f32 otherwise."""
    try:
        kind = jax.devices()[0].device_kind.lower()
    except Exception:
        return jnp.bfloat16
    if any(t in kind for t in ("v2", "v3", "v4", "v5", "lite")):
        return jnp.float32
    return jnp.bfloat16


def discriminator_kernel(x_ref, w1_ref, b1_ref, w2_ref, b2_ref, w3_ref, b3_ref,
                         o_ref, *, act_dtype):
    # x tile: [TB, F] f32 -> bf16 for the MXU (accumulation stays f32).
    x = x_ref[...].astype(jnp.bfloat16)

    # Linear(text_shape, 512): bias add in f32, LeakyReLU in act_dtype
    # (bf16 on v6e/v7x halves the VALU epilogue work; the next MXU wants bf16 anyway).
    h1 = jnp.dot(x, w1_ref[...], preferred_element_type=jnp.float32) + b1_ref[...]
    h1 = _leaky_relu(h1.astype(act_dtype))

    # Linear(512, 512) + Dropout(0.4) [eval mode: identity] + LeakyReLU(0.2)
    h2 = jnp.dot(h1.astype(jnp.bfloat16), w2_ref[...],
                 preferred_element_type=jnp.float32) + b2_ref[...]
    # TODO(synk): training-mode dropout (p=0.4) would use pltpu.prng_seed +
    # pltpu.prng_random_bits; omitted to match eval-mode forward semantics.
    h2 = _leaky_relu(h2.astype(act_dtype))

    # Linear(512, 1) as a transposed GEMV: [1,512] . [TB,512]^T -> [1, TB].
    # Lane-dense output block (batch on lanes => unmasked vst); the contracting
    # (1,)/(1,) dims lower to a transposed-RHS MXU matmul (no h2 XLU transpose).
    out = lax.dot_general(
        w3_ref[...], h2.astype(jnp.bfloat16),
        dimension_numbers=(((1,), (1,)), ((), ())),
        preferred_element_type=jnp.float32)
    o_ref[...] = (out + b3_ref[0]).astype(o_ref.dtype)


def _round_up(x, m):
    return ((x + m - 1) // m) * m


def _select_batch_tile(B, tb_max=1024):
    # Tiny batch: one full-batch tile (block dims == array dims is always legal).
    if B <= 256:
        return B
    # Otherwise: >=2 grid steps (engages both v7x TCs via "parallel"), 128-aligned
    # rows, capped at tb_max (~5-6 MB peak VMEM, fine even for v5e's 16 MiB scoped).
    return min(tb_max, _round_up(pl.cdiv(B, 2), 128))


def discriminator_forward(x, params, tb_max=1024, act_dtype=None):
    """x: [B, text_shape] float32 -> validity: [B, 1] float32."""
    w1, b1, w2, b2, w3, b3 = params
    B, F = x.shape
    H = w1.shape[1]
    if act_dtype is None:
        act_dtype = _default_act_dtype()

    TB = _select_batch_tile(B, tb_max)
    grid = (pl.cdiv(B, TB),)   # no host-side padding: ragged last block is masked

    flops = 2 * B * (F * H + H * H + H)
    bytes_accessed = int(
        x.size * x.dtype.itemsize
        + sum(int(p.size) * p.dtype.itemsize for p in params)
        + B * 4)

    kernel = functools.partial(discriminator_kernel, act_dtype=act_dtype)

    out = pl.pallas_call(
        kernel,
        out_shape=jax.ShapeDtypeStruct((1, B), jnp.float32),
        grid_spec=pltpu.PrefetchScalarGridSpec(
            num_scalar_prefetch=0,
            grid=grid,
            in_specs=[
                pl.BlockSpec((TB, F), lambda i: (i, 0)),   # x: batch-tiled
                pl.BlockSpec((F, H), lambda i: (0, 0)),    # w1 (bf16, resident)
                pl.BlockSpec((1, H), lambda i: (0, 0)),    # b1 (f32)
                pl.BlockSpec((H, H), lambda i: (0, 0)),    # w2 (bf16, resident)
                pl.BlockSpec((1, H), lambda i: (0, 0)),    # b2 (f32)
                pl.BlockSpec((1, H), lambda i: (0, 0)),    # w3 row (bf16)
                pl.BlockSpec(memory_space=pltpu.MemorySpace.SMEM),  # b3 scalar
            ],
            out_specs=pl.BlockSpec((1, TB), lambda i: (0, i)),  # lane-dense out
        ),
        compiler_params=pltpu.CompilerParams(
            dimension_semantics=("parallel",)),
        cost_estimate=pl.CostEstimate(flops=flops, transcendentals=0,
                                      bytes_accessed=bytes_accessed),
    )(x, w1, b1, w2, b2, w3, b3)

    return out[0, :].reshape(B, 1)


def init_params(key, text_shape):
    """PyTorch-Linear-style uniform init; kernel layout: W as [in,out] bf16,
    w3 stored as its (1, 512) transpose row, biases f32 (b3 as a (1,) scalar)."""
    def linear(key, fan_in, fan_out):
        k_w, k_b = jax.random.split(key)
        bound = 1.0 / jnp.sqrt(fan_in)
        w = jax.random.uniform(k_w, (fan_in, fan_out), jnp.float32, -bound, bound)
        b = jax.random.uniform(k_b, (fan_out,), jnp.float32, -bound, bound)
        return w, b

    k1, k2, k3 = jax.random.split(key, 3)
    w1, b1 = linear(k1, text_shape, HIDDEN)
    w2, b2 = linear(k2, HIDDEN, HIDDEN)
    w3, b3 = linear(k3, HIDDEN, 1)
    return (w1.astype(jnp.bfloat16), b1.reshape(1, HIDDEN),
            w2.astype(jnp.bfloat16), b2.reshape(1, HIDDEN),
            w3.T.astype(jnp.bfloat16),   # (1, 512)
            b3.reshape(1,))


def reference_forward(x, params, act_dtype=jnp.bfloat16):
    """Pure-JAX reference with the same bf16 weight / activation rounding points."""
    w1, b1, w2, b2, w3, b3 = params
    f32 = jnp.float32
    hp = jax.lax.Precision.HIGHEST

    xb = x.astype(jnp.bfloat16).astype(f32)
    h1 = jnp.dot(xb, w1.astype(f32), precision=hp) + b1
    h1 = _leaky_relu(h1.astype(act_dtype))
    h2 = jnp.dot(h1.astype(jnp.bfloat16).astype(f32), w2.astype(f32),
                 precision=hp) + b2
    h2 = _leaky_relu(h2.astype(act_dtype))
    # Dropout(0.4) == identity in eval mode.
    out = jnp.dot(h2.astype(jnp.bfloat16).astype(f32), w3.astype(f32).T,
                  precision=hp) + b3
    return out


if __name__ == "__main__":
    TEXT_SHAPE = 32

    key = jax.random.PRNGKey(0)
    k_x, k_x2, k_p = jax.random.split(key, 3)
    params = init_params(k_p, TEXT_SHAPE)
    act_dtype = _default_act_dtype()

    # Small-batch path (single full-batch tile).
    B = 8
    x = jax.random.normal(k_x, (B, TEXT_SHAPE), dtype=jnp.float32)
    validity = discriminator_forward(x, params, act_dtype=act_dtype)
    jax.block_until_ready(validity)
    ref = reference_forward(x, params, act_dtype=act_dtype)
    assert validity.shape == (B, 1)
    assert jnp.allclose(validity, ref, atol=2e-3, rtol=2e-3)

    # Multi-tile path (>=2 grid steps, ragged last block, no host-side pad).
    B2 = 300
    x2 = jax.random.normal(k_x2, (B2, TEXT_SHAPE), dtype=jnp.float32)
    validity2 = discriminator_forward(x2, params, act_dtype=act_dtype)
    jax.block_until_ready(validity2)
    ref2 = reference_forward(x2, params, act_dtype=act_dtype)
    assert validity2.shape == (B2, 1)
    assert jnp.allclose(validity2, ref2, atol=2e-3, rtol=2e-3)

    print("KERNEL_OK")
</pallas_src>

<mosaic_0001>
module attributes {stable_mosaic.version = 11 : i64} {
  func.func @discriminator_kernel(%arg0: i32, %arg1: memref<8x32xf32, #tpu.memory_space<vmem>>, %arg2: memref<32x512xbf16, #tpu.memory_space<vmem>>, %arg3: memref<1x512xf32, #tpu.memory_space<vmem>>, %arg4: memref<512x512xbf16, #tpu.memory_space<vmem>>, %arg5: memref<1x512xf32, #tpu.memory_space<vmem>>, %arg6: memref<1x512xbf16, #tpu.memory_space<vmem>>, %arg7: memref<1xf32, #tpu.memory_space<smem>>, %arg8: memref<1x8xf32, #tpu.memory_space<vmem>>) attributes {dimension_semantics = [#tpu.dimension_semantics<parallel>], iteration_bounds = array<i64: 1>, scalar_prefetch = 0 : i64, scratch_operands = 0 : i64, tpu.core_type = #tpu.core_type<tc>, window_params = [{transform_indices = @transform_0, window_bounds = array<i64: 8, 32>}, {pipeline_mode = #tpu.pipeline_mode<synchronous>, transform_indices = @transform_1, window_bounds = array<i64: 32, 512>}, {pipeline_mode = #tpu.pipeline_mode<synchronous>, transform_indices = @transform_2, window_bounds = array<i64: 1, 512>}, {pipeline_mode = #tpu.pipeline_mode<synchronous>, transform_indices = @transform_3, window_bounds = array<i64: 512, 512>}, {pipeline_mode = #tpu.pipeline_mode<synchronous>, transform_indices = @transform_4, window_bounds = array<i64: 1, 512>}, {pipeline_mode = #tpu.pipeline_mode<synchronous>, transform_indices = @transform_5, window_bounds = array<i64: 1, 512>}, {transform_indices = @transform_6, window_bounds = array<i64: 1>}, {transform_indices = @transform_7, window_bounds = array<i64: 1, 8>}]} {
    %c0 = arith.constant 0 : index
    %c0_0 = arith.constant 0 : index
    %0 = vector.load %arg1[%c0, %c0_0] : memref<8x32xf32, #tpu.memory_space<vmem>>, vector<8x32xf32>
    %1 = arith.truncf %0 : vector<8x32xf32> to vector<8x32xbf16>
    %c0_1 = arith.constant 0 : index
    %c0_2 = arith.constant 0 : index
    %2 = vector.load %arg2[%c0_1, %c0_2] : memref<32x512xbf16, #tpu.memory_space<vmem>>, vector<32x512xbf16>
    %cst = arith.constant dense<0.000000e+00> : vector<8x512xf32>
    %3 = tpu.matmul %1, %2, %cst {dimension_numbers = #tpu.dot_dimension_numbers<[1], [0], [0], [1], [0, 0, 1, 1], [], []>} : vector<8x32xbf16>, vector<32x512xbf16>, vector<8x512xf32> -> vector<8x512xf32>
    %c0_3 = arith.constant 0 : index
    %c0_4 = arith.constant 0 : index
    %4 = vector.load %arg3[%c0_3, %c0_4] : memref<1x512xf32, #tpu.memory_space<vmem>>, vector<1x512xf32>
    %5 = vector.broadcast %4 : vector<1x512xf32> to vector<8x512xf32>
    %6 = arith.addf %3, %5 : vector<8x512xf32>
    %7 = arith.truncf %6 : vector<8x512xf32> to vector<8x512xbf16>
    %cst_5 = arith.constant 2.001950e-01 : bf16
    %8 = vector.broadcast %cst_5 : bf16 to vector<8x512xbf16>
    %9 = arith.mulf %7, %8 : vector<8x512xbf16>
    %10 = arith.maximumf %7, %9 : vector<8x512xbf16>
    %c0_6 = arith.constant 0 : index
    %c0_7 = arith.constant 0 : index
    %11 = vector.load %arg4[%c0_6, %c0_7] : memref<512x512xbf16, #tpu.memory_space<vmem>>, vector<512x512xbf16>
    %cst_8 = arith.constant dense<0.000000e+00> : vector<8x512xf32>
    %12 = tpu.matmul %10, %11, %cst_8 {dimension_numbers = #tpu.dot_dimension_numbers<[1], [0], [0], [1], [0, 0, 1, 1], [], []>} : vector<8x512xbf16>, vector<512x512xbf16>, vector<8x512xf32> -> vector<8x512xf32>
    %c0_9 = arith.constant 0 : index
    %c0_10 = arith.constant 0 : index
    %13 = vector.load %arg5[%c0_9, %c0_10] : memref<1x512xf32, #tpu.memory_space<vmem>>, vector<1x512xf32>
    %14 = vector.broadcast %13 : vector<1x512xf32> to vector<8x512xf32>
    %15 = arith.addf %12, %14 : vector<8x512xf32>
    %16 = arith.truncf %15 : vector<8x512xf32> to vector<8x512xbf16>
    %cst_11 = arith.constant 2.001950e-01 : bf16
    %17 = vector.broadcast %cst_11 : bf16 to vector<8x512xbf16>
    %18 = arith.mulf %16, %17 : vector<8x512xbf16>
    %19 = arith.maximumf %16, %18 : vector<8x512xbf16>
    %c0_12 = arith.constant 0 : index
    %c0_13 = arith.constant 0 : index
    %20 = vector.load %arg6[%c0_12, %c0_13] : memref<1x512xbf16, #tpu.memory_space<vmem>>, vector<1x512xbf16>
    %cst_14 = arith.constant dense<0.000000e+00> : vector<1x8xf32>
    %21 = tpu.matmul %20, %19, %cst_14 {dimension_numbers = #tpu.dot_dimension_numbers<[1], [1], [0], [0], [0, 0, 1, 0], [], []>} : vector<1x512xbf16>, vector<8x512xbf16>, vector<1x8xf32> -> vector<1x8xf32>
    %c0_15 = arith.constant 0 : index
    %22 = memref.load %arg7[%c0_15] : memref<1xf32, #tpu.memory_space<smem>>
    %23 = vector.broadcast %22 : f32 to vector<1x8xf32>
    %24 = arith.addf %21, %23 : vector<1x8xf32>
    %c0_16 = arith.constant 0 : index
    %c0_17 = arith.constant 0 : index
    %25 = vector.load %arg8[%c0_16, %c0_17] : memref<1x8xf32, #tpu.memory_space<vmem>>, vector<1x8xf32>
    tpu.vector_store %arg8[%c0_16, %c0_17], %24 {strides = array<i32>} : memref<1x8xf32, #tpu.memory_space<vmem>>, vector<1x8xf32>,
    return
  }
  func.func @transform_0(%arg0: i32) -> (i32, i32) {
    %c0_i32 = arith.constant 0 : i32
    %c0_i32_0 = arith.constant 0 : i32
    return %arg0, %c0_i32 : i32, i32
  }
  func.func @transform_1(%arg0: i32) -> (i32, i32) {
    %c0_i32 = arith.constant 0 : i32
    %c0_i32_0 = arith.constant 0 : i32
    %c0_i32_1 = arith.constant 0 : i32
    return %c0_i32, %c0_i32_0 : i32, i32
  }
  func.func @transform_2(%arg0: i32) -> (i32, i32) {
    %c0_i32 = arith.constant 0 : i32
    %c0_i32_0 = arith.constant 0 : i32
    %c0_i32_1 = arith.constant 0 : i32
    return %c0_i32, %c0_i32_0 : i32, i32
  }
  func.func @transform_3(%arg0: i32) -> (i32, i32) {
    %c0_i32 = arith.constant 0 : i32
    %c0_i32_0 = arith.constant 0 : i32
    %c0_i32_1 = arith.constant 0 : i32
    return %c0_i32, %c0_i32_0 : i32, i32
  }
  func.func @transform_4(%arg0: i32) -> (i32, i32) {
    %c0_i32 = arith.constant 0 : i32
    %c0_i32_0 = arith.constant 0 : i32
    %c0_i32_1 = arith.constant 0 : i32
    return %c0_i32, %c0_i32_0 : i32, i32
  }
  func.func @transform_5(%arg0: i32) -> (i32, i32) {
    %c0_i32 = arith.constant 0 : i32
    %c0_i32_0 = arith.constant 0 : i32
    %c0_i32_1 = arith.constant 0 : i32
    return %c0_i32, %c0_i32_0 : i32, i32
  }
  func.func @transform_6(%arg0: i32) -> i32 {
    %c0_i32 = arith.constant 0 : i32
    %c0_i32_0 = arith.constant 0 : i32
    return %c0_i32 : i32
  }
  func.func @transform_7(%arg0: i32) -> (i32, i32) {
    %c0_i32 = arith.constant 0 : i32
    %c0_i32_0 = arith.constant 0 : i32
    return %c0_i32, %arg0 : i32, i32
  }
}

</mosaic_0001>

<llo_original>
// kernel: tpu_custom_call.1
$region0: #{tpu_custom_call.1}
  #allocation0 [shape = 'u32[]', space=smem, size = 0x4, offset = 0x4, fixed_abs, tag = 'smem constant byte address 0x4 - core index']
  #allocation1 [shape = 'u32[144,128]{1,0:T(1,128)}', space=vmem, size = 0x12000, scoped, tag = 'internal scratch']
  #allocation2 [shape = 'f32[1]{0:T(128)S(6)}', space=smem, size = 0x200, scoped, tag = 'scoped memory for tpu_custom_call.1']
  %s0 = inlined_call_operand.hbm [shape: f32[8,32], index: 0, kind: input, shape index: {}]
  %s1 = inlined_call_operand.hbm [shape: bf16[32,512], index: 1, kind: input, shape index: {}]
  %s2 = inlined_call_operand.vmem [shape: f32[1,512], index: 2, kind: input, shape index: {}]
  %s3 = inlined_call_operand.hbm [shape: bf16[512,512], index: 3, kind: input, shape index: {}]
  %s4 = inlined_call_operand.vmem [shape: f32[1,512], index: 4, kind: input, shape index: {}]
  %s5 = inlined_call_operand.hbm [shape: bf16[1,512], index: 5, kind: input, shape index: {}]
  %s6 = inlined_call_operand.<no memory space> [shape: f32[1], index: 6, kind: input, shape index: {}]
  %s7 = inlined_call_operand.hbm [shape: f32[1,8], index: 7, kind: output, shape index: {}]
  %s8 = sld [smem:[#allocation0]]
  $region54: #{tpu_custom_call.1} parent=0
    _
  %s10 = ssub.s32 1, %s8
  %s11 = scalar_select 0, %s10, %s8
  %12 = sst [smem:[#allocation2]] %s6
  $region1: #{tpu_custom_call.1} parent=0
    #allocation3 [shape = 'u8[4096]{0}', space=vmem, size = 0x1000, scoped, tag = 'input window, operand 0, single buffered']
    #allocation4 [shape = 's32[1]{0}', space=sflag, size = 0x4, scoped, tag = 'scoped memory for tpu_custom_call.1']
    #allocation5 [shape = 's32[1]{0}', space=sflag, size = 0x4, scoped, tag = 'scoped memory for tpu_custom_call.1']
    #allocation6 [shape = 'u8[32768]{0}', space=vmem, size = 0x8000, scoped, tag = 'input window, operand 1, single buffered']
    #allocation7 [shape = 's32[1]{0}', space=sflag, size = 0x4, scoped, tag = 'scoped memory for tpu_custom_call.1']
    #allocation8 [shape = 'u8[524288]{0}', space=vmem, size = 0x80000, scoped, tag = 'input window, operand 3, single buffered']
    #allocation9 [shape = 'u8[2048]{0}', space=vmem, size = 0x800, scoped, tag = 'input window, operand 5, single buffered']
    #allocation10 [shape = 's32[1]{0}', space=sflag, size = 0x4, scoped, tag = 'scoped memory for tpu_custom_call.1']
    #allocation11 [shape = 'u8[512]{0}', space=vmem, size = 0x400, scoped, tag = 'output window, operand 0, single buffered']
    %13 = vsyncpa [#allocation4], 0
    %14 = vsyncpa [#allocation7], 0
    %15 = vsyncpa [#allocation10], 0
    %16 = vsyncpa [#allocation5], 0
    // Predicated region
    $region2: #{tpu_custom_call.1} parent=1 // pred_check
      _
    $region3: #{tpu_custom_call.1} parent=1 // pred_check_branch
      %18 = sbr.rel (0) target = $region5
    $region4: #{tpu_custom_call.1} parent=1 // pred_region
      %s20 = ssub.s32 128, 128
      %21 = vsyncadd [#allocation4], %s20
      %s23 = sshll.u32 [#allocation3], 4
      %s24 = int_to_ptr.vmem [resolvable:$true] %s23
      %26 = dma.hbm_to_vmem [thread:$0]  %s0, 128, %s24, [#allocation4]
    $region5: #{tpu_custom_call.1} parent=1 // pred_fallthru
      _
    // Predicated region
    $region6: #{tpu_custom_call.1} parent=1 // pred_check
      _
    $region7: #{tpu_custom_call.1} parent=1 // pred_check_branch
      %28 = sbr.rel (0) target = $region9
    $region8: #{tpu_custom_call.1} parent=1 // pred_region
      %s30 = ssub.s32 1024, 1024
      %31 = vsyncadd [#allocation7], %s30
      %s32 = sshll.u32 [#allocation6], 4
      %s33 = int_to_ptr.vmem [resolvable:$true] %s32
      %38 = dma.hbm_to_vmem [thread:$0]  %s1, 1024, %s33, [#allocation7], 256, 256, 16
    $region9: #{tpu_custom_call.1} parent=1 // pred_fallthru
      _
    // Predicated region
    $region10: #{tpu_custom_call.1} parent=1 // pred_check
      _
    $region11: #{tpu_custom_call.1} parent=1 // pred_check_branch
      %40 = sbr.rel (0) target = $region13
    $region12: #{tpu_custom_call.1} parent=1 // pred_region
      _
    $region13: #{tpu_custom_call.1} parent=1 // pred_fallthru
      _
    // Predicated region
    $region14: #{tpu_custom_call.1} parent=1 // pred_check
      _
    $region15: #{tpu_custom_call.1} parent=1 // pred_check_branch
      %42 = sbr.rel (0) target = $region17
    $region16: #{tpu_custom_call.1} parent=1 // pred_region
      %s44 = ssub.s32 16384, 16384
      %45 = vsyncadd [#allocation7], %s44
      %s46 = sshll.u32 [#allocation8], 4
      %s47 = int_to_ptr.vmem [resolvable:$true] %s46
      %52 = dma.hbm_to_vmem [thread:$0]  %s3, 16384, %s47, [#allocation7], 256, 256, 16
    $region17: #{tpu_custom_call.1} parent=1 // pred_fallthru
      _
    // Predicated region
    $region18: #{tpu_custom_call.1} parent=1 // pred_check
      _
    $region19: #{tpu_custom_call.1} parent=1 // pred_check_branch
      %54 = sbr.rel (0) target = $region21
    $region20: #{tpu_custom_call.1} parent=1 // pred_region
      _
    $region21: #{tpu_custom_call.1} parent=1 // pred_fallthru
      _
    // Predicated region
    $region22: #{tpu_custom_call.1} parent=1 // pred_check
      _
    $region23: #{tpu_custom_call.1} parent=1 // pred_check_branch
      %56 = sbr.rel (0) target = $region25
    $region24: #{tpu_custom_call.1} parent=1 // pred_region
      %s58 = ssub.s32 64, 64
      %59 = vsyncadd [#allocation10], %s58
      %s61 = sshll.u32 [#allocation9], 4
      %s62 = int_to_ptr.vmem [resolvable:$true] %s61
      %64 = dma.hbm_to_vmem [thread:$0]  %s5, 64, %s62, [#allocation10]
    $region25: #{tpu_custom_call.1} parent=1 // pred_fallthru
      _
    // Predicated region
    $region26: #{tpu_custom_call.1} parent=1 // pred_check
      _
    $region27: #{tpu_custom_call.1} parent=1 // pred_check_branch
      %66 = sbr.rel (0) target = $region29
    $region28: #{tpu_custom_call.1} parent=1 // pred_region
      _
    $region29: #{tpu_custom_call.1} parent=1 // pred_fallthru
      _
    // Predicated region
    $region30: #{tpu_custom_call.1} parent=1 // pred_check
      _
    $region31: #{tpu_custom_call.1} parent=1 // pred_check_branch
      %68 = sbr.rel (0) target = $region33
    $region32: #{tpu_custom_call.1} parent=1 // pred_region
      %69 = dma.done [#allocation4], 128
    $region33: #{tpu_custom_call.1} parent=1 // pred_fallthru
      _
    // Predicated region
    $region34: #{tpu_custom_call.1} parent=1 // pred_check
      _
    $region35: #{tpu_custom_call.1} parent=1 // pred_check_branch
      %71 = sbr.rel (0) target = $region37
    $region36: #{tpu_custom_call.1} parent=1 // pred_region
      %72 = dma.done [#allocation7], 1024
    $region37: #{tpu_custom_call.1} parent=1 // pred_fallthru
      _
    // Predicated region
    $region38: #{tpu_custom_call.1} parent=1 // pred_check
      _
    $region39: #{tpu_custom_call.1} parent=1 // pred_check_branch
      %74 = sbr.rel (0) target = $region41
    $region40: #{tpu_custom_call.1} parent=1 // pred_region
      %75 = dma.done [#allocation7], 16384
    $region41: #{tpu_custom_call.1} parent=1 // pred_fallthru
      _
    // Predicated region
    $region42: #{tpu_custom_call.1} parent=1 // pred_check
      _
    $region43: #{tpu_custom_call.1} parent=1 // pred_check_branch
      %77 = sbr.rel (0) target = $region45
    $region44: #{tpu_custom_call.1} parent=1 // pred_region
      %78 = dma.done [#allocation10], 64
    $region45: #{tpu_custom_call.1} parent=1 // pred_fallthru
      _
    %v81 = vld [vmem:[#allocation3] sm:$0xff]
    %v82 = vpack.c.bf16 %v81, %v81
    %v83 = vld [vmem:[#allocation6] sm:$0xff]
    %v84 = vld [vmem:[#allocation6 + $0x8] sm:$0xff]
    %v85 = vld [vmem:[#allocation6 + $0x10] sm:$0xff]
    %v86 = vld [vmem:[#allocation6 + $0x18] sm:$0xff]
    %v87 = vld [vmem:[#allocation6 + $0x20] sm:$0xff]
    %v88 = vld [vmem:[#allocation6 + $0x28] sm:$0xff]
    %v89 = vld [vmem:[#allocation6 + $0x30] sm:$0xff]
    %v90 = vld [vmem:[#allocation6 + $0x38] sm:$0xff]
    %v91 = vld [vmem:[%s2] sm:$0xf]
    %v93 = vlaneseq
    %v94 = vshrl.u32 %v93, 7
    %v95 = vsub.s32 0, %v94
    %v96 = vrot.slane %v91, %v95
    %v97 = vlaneseq
    %v98 = vshrl.u32 %v97, 7
    %v99 = vsub.s32 1, %v98
    %v100 = vrot.slane %v91, %v99
    %v101 = vlaneseq
    %v102 = vshrl.u32 %v101, 7
    %v103 = vsub.s32 2, %v102
    %v104 = vrot.slane %v91, %v103
    %v105 = vlaneseq
    %v106 = vshrl.u32 %v105, 7
    %v107 = vsub.s32 3, %v106
    %v108 = vrot.slane %v91, %v107
    %v121 = vunpack.c.l.b16 %v83
    %v122 = vunpack.c.h.b16 %v83
    %v123 = vunpack.c.l.b16 %v84
    %v124 = vunpack.c.h.b16 %v84
    %v125 = vunpack.c.l.b16 %v85
    %v126 = vunpack.c.h.b16 %v85
    %v127 = vunpack.c.l.b16 %v86
    %v128 = vunpack.c.h.b16 %v86
    %v129 = vunpack.c.l.b16 %v87
    %v130 = vunpack.c.h.b16 %v87
    %v131 = vunpack.c.l.b16 %v88
    %v132 = vunpack.c.h.b16 %v88
    %v133 = vunpack.c.l.b16 %v89
    %v134 = vunpack.c.h.b16 %v89
    %v135 = vunpack.c.l.b16 %v90
    %v136 = vunpack.c.h.b16 %v90
    %v137 = vpack.c.b16 %v125, %v121
    %v138 = vpack.c.b16 %v126, %v122
    %v139 = vpack.c.b16 %v127, %v123
    %v140 = vpack.c.b16 %v128, %v124
    %v141 = vpack.c.b16 %v133, %v129
    %v142 = vpack.c.b16 %v134, %v130
    %v143 = vpack.c.b16 %v135, %v131
    %v144 = vpack.c.b16 %v136, %v132
    %vm153 = vcmask 261120
    %v155 = vsel %vm153, %v82, 0
    %157 = vmatprep.subr.bf16.mxu0 0
    %158 = vmatpush1.bf16.msra.mxu0 0
    %159 = vmatprep.subr.bf16.mxu0 0
    %160 = vmatpush1.bf16.msra.mxu0 0
    %161 = vmatprep.subr.bf16.mxu0 0
    %162 = vmatpush1.bf16.msra.mxu0 0
    %163 = vmatprep.subr.bf16.mxu0 0
    %164 = vmatpush1.bf16.msra.mxu0 0
    %165 = vmatprep.subr.bf16.mxu0 0
    %166 = vmatpush1.bf16.msra.mxu0 0
    %167 = vmatprep.subr.bf16.mxu0 0
    %168 = vmatpush1.bf16.msra.mxu0 0
    %169 = vmatprep.subr.bf16.mxu0 %v142
    %170 = vmatpush1.bf16.msra.mxu0 %v141
    %171 = vmatprep.subr.bf16.mxu0 %v138
    %172 = vmatpush1.bf16.msra.mxu0 %v137
    %173 = vmatprep.subr.bf16.mxu0 0
    %174 = vmatpush2.bf16.msra.mxu0 0
    %175 = vmatprep.subr.bf16.mxu0 0
    %176 = vmatpush2.bf16.msra.mxu0 0
    %177 = vmatprep.subr.bf16.mxu0 0
    %178 = vmatpush2.bf16.msra.mxu0 0
    %179 = vmatprep.subr.bf16.mxu0 0
    %180 = vmatpush2.bf16.msra.mxu0 0
    %181 = vmatprep.subr.bf16.mxu0 0
    %182 = vmatpush2.bf16.msra.mxu0 0
    %183 = vmatprep.subr.bf16.mxu0 0
    %184 = vmatpush2.bf16.msra.mxu0 0
    %185 = vmatprep.subr.bf16.mxu0 0
    %186 = vmatpush2.bf16.msra.mxu0 0
    %187 = vmatprep.subr.bf16.mxu0 0
    %188 = vmatpush2.bf16.msra.mxu0 0
    %189 = vmatprep.mubr.bf16.mxu0 0
    %190 = vmatmul.mubr.bf16.gmra.mxu0 %v155
    %v191 = vpop.f32.mrf.mxu0
    %v192 = vadd.f32 %v96, %v191
    %v193 = vpop.f32.mrf.mxu0
    %v194 = vadd.f32 %v100, %v193
    %v195 = vpop.f32.mrf.mxu0
    %v196 = vpop.f32.mrf.mxu0
    %197 = vdwg.mxu0
    %198 = vmatprep.subr.bf16.mxu0 0
    %199 = vmatpush1.bf16.msra.mxu0 0
    %200 = vmatprep.subr.bf16.mxu0 0
    %201 = vmatpush1.bf16.msra.mxu0 0
    %202 = vmatprep.subr.bf16.mxu0 0
    %203 = vmatpush1.bf16.msra.mxu0 0
    %204 = vmatprep.subr.bf16.mxu0 0
    %205 = vmatpush1.bf16.msra.mxu0 0
    %206 = vmatprep.subr.bf16.mxu0 0
    %207 = vmatpush1.bf16.msra.mxu0 0
    %208 = vmatprep.subr.bf16.mxu0 0
    %209 = vmatpush1.bf16.msra.mxu0 0
    %210 = vmatprep.subr.bf16.mxu0 %v144
    %211 = vmatpush1.bf16.msra.mxu0 %v143
    %212 = vmatprep.subr.bf16.mxu0 %v140
    %213 = vmatpush1.bf16.msra.mxu0 %v139
    %214 = vmatprep.subr.bf16.mxu0 0
    %215 = vmatpush2.bf16.msra.mxu0 0
    %216 = vmatprep.subr.bf16.mxu0 0
    %217 = vmatpush2.bf16.msra.mxu0 0
    %218 = vmatprep.subr.bf16.mxu0 0
    %219 = vmatpush2.bf16.msra.mxu0 0
    %220 = vmatprep.subr.bf16.mxu0 0
    %221 = vmatpush2.bf16.msra.mxu0 0
    %222 = vmatprep.subr.bf16.mxu0 0
    %223 = vmatpush2.bf16.msra.mxu0 0
    %224 = vmatprep.subr.bf16.mxu0 0
    %225 = vmatpush2.bf16.msra.mxu0 0
    %226 = vmatprep.subr.bf16.mxu0 0
    %227 = vmatpush2.bf16.msra.mxu0 0
    %228 = vmatprep.subr.bf16.mxu0 0
    %229 = vmatpush2.bf16.msra.mxu0 0
    %230 = vmatprep.mubr.bf16.mxu0 0
    %231 = vmatmul.mubr.bf16.gmra.mxu0 %v155
    %v232 = vpop.f32.mrf.mxu0
    %v233 = vadd.f32 %v104, %v232
    %v234 = vpop.f32.mrf.mxu0
    %v235 = vadd.f32 %v108, %v234
    %v236 = vpop.f32.mrf.mxu0
    %v237 = vpop.f32.mrf.mxu0
    %238 = vdwg.mxu0
    %v239 = vpack.c.bf16 %v192, %v192
    %v240 = vpack.c.bf16 %v194, %v194
    %v241 = vpack.c.bf16 %v233, %v233
    %v242 = vpack.c.bf16 %v235, %v235
    %v243 = vmul.bf16 %v239, 1045249613
    %v244 = vmul.bf16 %v240, 1045249613
    %v245 = vmul.bf16 %v241, 1045249613
    %v246 = vmul.bf16 %v242, 1045249613
    %v247 = vmax.bf16 %v239, %v243
    %v248 = vmax.bf16 %v240, %v244
    %v249 = vmax.bf16 %v241, %v245
    %v250 = vmax.bf16 %v242, %v246
    %v251 = vld [vmem:[#allocation8] sm:$0xff]
    %v252 = vld [vmem:[#allocation8 + $0x8] sm:$0xff]
    %v253 = vld [vmem:[#allocation8 + $0x10] sm:$0xff]
    %v254 = vld [vmem:[#allocation8 + $0x18] sm:$0xff]
    %v255 = vld [vmem:[#allocation8 + $0x20] sm:$0xff]
    %v256 = vld [vmem:[#allocation8 + $0x28] sm:$0xff]
    %v257 = vld [vmem:[#allocation8 + $0x30] sm:$0xff]
    %v258 = vld [vmem:[#allocation8 + $0x38] sm:$0xff]
    %v259 = vld [vmem:[#allocation8 + $0x40] sm:$0xff]
    %v260 = vld [vmem:[#allocation8 + $0x48] sm:$0xff]
    %v261 = vld [vmem:[#allocation8 + $0x50] sm:$0xff]
    %v262 = vld [vmem:[#allocation8 + $0x58] sm:$0xff]
    %v263 = vld [vmem:[#allocation8 + $0x60] sm:$0xff]
    %v264 = vld [vmem:[#allocation8 + $0x68] sm:$0xff]
    %v265 = vld [vmem:[#allocation8 + $0x70] sm:$0xff]
    %v266 = vld [vmem:[#allocation8 + $0x78] sm:$0xff]
    %v267 = vld [vmem:[#allocation8 + $0x80] sm:$0xff]
    %v268 = vld [vmem:[#allocation8 + $0x88] sm:$0xff]
    %v269 = vld [vmem:[#allocation8 + $0x90] sm:$0xff]
    %v270 = vld [vmem:[#allocation8 + $0x98] sm:$0xff]
    %v271 = vld [vmem:[#allocation8 + $0xa0] sm:$0xff]
    %v272 = vld [vmem:[#allocation8 + $0xa8] sm:$0xff]
    %v273 = vld [vmem:[#allocation8 + $0xb0] sm:$0xff]
    %v274 = vld [vmem:[#allocation8 + $0xb8] sm:$0xff]
    %v275 = vld [vmem:[#allocation8 + $0xc0] sm:$0xff]
    %v276 = vld [vmem:[#allocation8 + $0xc8] sm:$0xff]
    %v277 = vld [vmem:[#allocation8 + $0xd0] sm:$0xff]
    %v278 = vld [vmem:[#allocation8 + $0xd8] sm:$0xff]
    %v279 = vld [vmem:[#allocation8 + $0xe0] sm:$0xff]
    %v280 = vld [vmem:[#allocation8 + $0xe8] sm:$0xff]
    %v281 = vld [vmem:[#allocation8 + $0xf0] sm:$0xff]
    %v282 = vld [vmem:[#allocation8 + $0xf8] sm:$0xff]
    %v283 = vld [vmem:[#allocation8 + $0x100] sm:$0xff]
    %v284 = vld [vmem:[#allocation8 + $0x108] sm:$0xff]
    %v285 = vld [vmem:[#allocation8 + $0x110] sm:$0xff]
    %v286 = vld [vmem:[#allocation8 + $0x118] sm:$0xff]
    %v287 = vld [vmem:[#allocation8 + $0x120] sm:$0xff]
    %v288 = vld [vmem:[#allocation8 + $0x128] sm:$0xff]
    %v289 = vld [vmem:[#allocation8 + $0x130] sm:$0xff]
    %v290 = vld [vmem:[#allocation8 + $0x138] sm:$0xff]
    %v291 = vld [vmem:[#allocation8 + $0x140] sm:$0xff]
    %v292 = vld [vmem:[#allocation8 + $0x148] sm:$0xff]
    %v293 = vld [vmem:[#allocation8 + $0x150] sm:$0xff]
    %v294 = vld [vmem:[#allocation8 + $0x158] sm:$0xff]
    %v295 = vld [vmem:[#allocation8 + $0x160] sm:$0xff]
    %v296 = vld [vmem:[#allocation8 + $0x168] sm:$0xff]
    %v297 = vld [vmem:[#allocation8 + $0x170] sm:$0xff]
    %v298 = vld [vmem:[#allocation8 + $0x178] sm:$0xff]
    %v299 = vld [vmem:[#allocation8 + $0x180] sm:$0xff]
    %v300 = vld [vmem:[#allocation8 + $0x188] sm:$0xff]
    %v301 = vld [vmem:[#allocation8 + $0x190] sm:$0xff]
    %v302 = vld [vmem:[#allocation8 + $0x198] sm:$0xff]
    %v303 = vld [vmem:[#allocation8 + $0x1a0] sm:$0xff]
    %v304 = vld [vmem:[#allocation8 + $0x1a8] sm:$0xff]
    %v305 = vld [vmem:[#allocation8 + $0x1b0] sm:$0xff]
    %v306 = vld [vmem:[#allocation8 + $0x1b8] sm:$0xff]
    %v307 = vld [vmem:[#allocation8 + $0x1c0] sm:$0xff]
    %v308 = vld [vmem:[#allocation8 + $0x1c8] sm:$0xff]
    %v309 = vld [vmem:[#allocation8 + $0x1d0] sm:$0xff]
    %v310 = vld [vmem:[#allocation8 + $0x1d8] sm:$0xff]
    %v311 = vld [vmem:[#allocation8 + $0x1e0] sm:$0xff]
    %v312 = vld [vmem:[#allocation8 + $0x1e8] sm:$0xff]
    %v313 = vld [vmem:[#allocation8 + $0x1f0] sm:$0xff]
    %v314 = vld [vmem:[#allocation8 + $0x1f8] sm:$0xff]
    %v315 = vld [vmem:[#allocation8 + $0x200] sm:$0xff]
    %v316 = vld [vmem:[#allocation8 + $0x208] sm:$0xff]
    %v317 = vld [vmem:[#allocation8 + $0x210] sm:$0xff]
    %v318 = vld [vmem:[#allocation8 + $0x218] sm:$0xff]
    %v319 = vld [vmem:[#allocation8 + $0x220] sm:$0xff]
    %v320 = vld [vmem:[#allocation8 + $0x228] sm:$0xff]
    %v321 = vld [vmem:[#allocation8 + $0x230] sm:$0xff]
    %v322 = vld [vmem:[#allocation8 + $0x238] sm:$0xff]
    %v323 = vld [vmem:[#allocation8 + $0x240] sm:$0xff]
    %v324 = vld [vmem:[#allocation8 + $0x248] sm:$0xff]
    %v325 = vld [vmem:[#allocation8 + $0x250] sm:$0xff]
    %v326 = vld [vmem:[#allocation8 + $0x258] sm:$0xff]
    %v327 = vld [vmem:[#allocation8 + $0x260] sm:$0xff]
    %v328 = vld [vmem:[#allocation8 + $0x268] sm:$0xff]
    %v329 = vld [vmem:[#allocation8 + $0x270] sm:$0xff]
    %v330 = vld [vmem:[#allocation8 + $0x278] sm:$0xff]
    %v331 = vld [vmem:[#allocation8 + $0x280] sm:$0xff]
    %v332 = vld [vmem:[#allocation8 + $0x288] sm:$0xff]
    %v333 = vld [vmem:[#allocation8 + $0x290] sm:$0xff]
    %v334 = vld [vmem:[#allocation8 + $0x298] sm:$0xff]
    %v335 = vld [vmem:[#allocation8 + $0x2a0] sm:$0xff]
    %v336 = vld [vmem:[#allocation8 + $0x2a8] sm:$0xff]
    %v337 = vld [vmem:[#allocation8 + $0x2b0] sm:$0xff]
    %v338 = vld [vmem:[#allocation8 + $0x2b8] sm:$0xff]
    %v339 = vld [vmem:[#allocation8 + $0x2c0] sm:$0xff]
    %v340 = vld [vmem:[#allocation8 + $0x2c8] sm:$0xff]
    %v341 = vld [vmem:[#allocation8 + $0x2d0] sm:$0xff]
    %v342 = vld [vmem:[#allocation8 + $0x2d8] sm:$0xff]
    %v343 = vld [vmem:[#allocation8 + $0x2e0] sm:$0xff]
    %v344 = vld [vmem:[#allocation8 + $0x2e8] sm:$0xff]
    %v345 = vld [vmem:[#allocation8 + $0x2f0] sm:$0xff]
    %v346 = vld [vmem:[#allocation8 + $0x2f8] sm:$0xff]
    %v347 = vld [vmem:[#allocation8 + $0x300] sm:$0xff]
    %v348 = vld [vmem:[#allocation8 + $0x308] sm:$0xff]
    %v349 = vld [vmem:[#allocation8 + $0x310] sm:$0xff]
    %v350 = vld [vmem:[#allocation8 + $0x318] sm:$0xff]
    %v351 = vld [vmem:[#allocation8 + $0x320] sm:$0xff]
    %v352 = vld [vmem:[#allocation8 + $0x328] sm:$0xff]
    %v353 = vld [vmem:[#allocation8 + $0x330] sm:$0xff]
    %v354 = vld [vmem:[#allocation8 + $0x338] sm:$0xff]
    %v355 = vld [vmem:[#allocation8 + $0x340] sm:$0xff]
    %v356 = vld [vmem:[#allocation8 + $0x348] sm:$0xff]
    %v357 = vld [vmem:[#allocation8 + $0x350] sm:$0xff]
    %v358 = vld [vmem:[#allocation8 + $0x358] sm:$0xff]
    %v359 = vld [vmem:[#allocation8 + $0x360] sm:$0xff]
    %v360 = vld [vmem:[#allocation8 + $0x368] sm:$0xff]
    %v361 = vld [vmem:[#allocation8 + $0x370] sm:$0xff]
    %v362 = vld [vmem:[#allocation8 + $0x378] sm:$0xff]
    %v363 = vld [vmem:[#allocation8 + $0x380] sm:$0xff]
    %v364 = vld [vmem:[#allocation8 + $0x388] sm:$0xff]
    %v365 = vld [vmem:[#allocation8 + $0x390] sm:$0xff]
    %v366 = vld [vmem:[#allocation8 + $0x398] sm:$0xff]
    %v367 = vld [vmem:[#allocation8 + $0x3a0] sm:$0xff]
    %v368 = vld [vmem:[#allocation8 + $0x3a8] sm:$0xff]
    %v369 = vld [vmem:[#allocation8 + $0x3b0] sm:$0xff]
    %v370 = vld [vmem:[#allocation8 + $0x3b8] sm:$0xff]
    %v371 = vld [vmem:[#allocation8 + $0x3c0] sm:$0xff]
    %v372 = vld [vmem:[#allocation8 + $0x3c8] sm:$0xff]
    %v373 = vld [vmem:[#allocation8 + $0x3d0] sm:$0xff]
    %v374 = vld [vmem:[#allocation8 + $0x3d8] sm:$0xff]
    %v375 = vld [vmem:[#allocation8 + $0x3e0] sm:$0xff]
    %v376 = vld [vmem:[#allocation8 + $0x3e8] sm:$0xff]
    %v377 = vld [vmem:[#allocation8 + $0x3f0] sm:$0xff]
    %v378 = vld [vmem:[#allocation8 + $0x3f8] sm:$0xff]
    %v379 = vld [vmem:[%s4] sm:$0xf]
    %v381 = vlaneseq
    %v382 = vshrl.u32 %v381, 7
    %v383 = vsub.s32 0, %v382
    %v384 = vrot.slane %v379, %v383
    %v385 = vlaneseq
    %v386 = vshrl.u32 %v385, 7
    %v387 = vsub.s32 1, %v386
    %v388 = vrot.slane %v379, %v387
    %v389 = vlaneseq
    %v390 = vshrl.u32 %v389, 7
    %v391 = vsub.s32 2, %v390
    %v392 = vrot.slane %v379, %v391
    %v393 = vlaneseq
    %v394 = vshrl.u32 %v393, 7
    %v395 = vsub.s32 3, %v394
    %v396 = vrot.slane %v379, %v395
    %v529 = vunpack.c.l.b16 %v251
    %v530 = vunpack.c.h.b16 %v251
    %v531 = vunpack.c.l.b16 %v252
    %v532 = vunpack.c.h.b16 %v252
    %v533 = vunpack.c.l.b16 %v253
    %v534 = vunpack.c.h.b16 %v253
    %v535 = vunpack.c.l.b16 %v254
    %v536 = vunpack.c.h.b16 %v254
    %v537 = vunpack.c.l.b16 %v255
    %v538 = vunpack.c.h.b16 %v255
    %v539 = vunpack.c.l.b16 %v256
    %v540 = vunpack.c.h.b16 %v256
    %v541 = vunpack.c.l.b16 %v257
    %v542 = vunpack.c.h.b16 %v257
    %v543 = vunpack.c.l.b16 %v258
    %v544 = vunpack.c.h.b16 %v258
    %v545 = vunpack.c.l.b16 %v259
    %v546 = vunpack.c.h.b16 %v259
    %v547 = vunpack.c.l.b16 %v260
    %v548 = vunpack.c.h.b16 %v260
    %v549 = vunpack.c.l.b16 %v261
    %v550 = vunpack.c.h.b16 %v261
    %v551 = vunpack.c.l.b16 %v262
    %v552 = vunpack.c.h.b16 %v262
    %v553 = vunpack.c.l.b16 %v263
    %v554 = vunpack.c.h.b16 %v263
    %v555 = vunpack.c.l.b16 %v264
    %v556 = vunpack.c.h.b16 %v264
    %v557 = vunpack.c.l.b16 %v265
    %v558 = vunpack.c.h.b16 %v265
    %v559 = vunpack.c.l.b16 %v266
    %v560 = vunpack.c.h.b16 %v266
    %v561 = vunpack.c.l.b16 %v267
    %v562 = vunpack.c.h.b16 %v267
    %v563 = vunpack.c.l.b16 %v268
    %v564 = vunpack.c.h.b16 %v268
    %v565 = vunpack.c.l.b16 %v269
    %v566 = vunpack.c.h.b16 %v269
    %v567 = vunpack.c.l.b16 %v270
    %v568 = vunpack.c.h.b16 %v270
    %v569 = vunpack.c.l.b16 %v271
    %v570 = vunpack.c.h.b16 %v271
    %v571 = vunpack.c.l.b16 %v272
    %v572 = vunpack.c.h.b16 %v272
    %v573 = vunpack.c.l.b16 %v273
    %v574 = vunpack.c.h.b16 %v273
    %v575 = vunpack.c.l.b16 %v274
    %v576 = vunpack.c.h.b16 %v274
    %v577 = vunpack.c.l.b16 %v275
    %v578 = vunpack.c.h.b16 %v275
    %v579 = vunpack.c.l.b16 %v276
    %v580 = vunpack.c.h.b16 %v276
    %v581 = vunpack.c.l.b16 %v277
    %v582 = vunpack.c.h.b16 %v277
    %v583 = vunpack.c.l.b16 %v278
    %v584 = vunpack.c.h.b16 %v278
    %v585 = vunpack.c.l.b16 %v279
    %v586 = vunpack.c.h.b16 %v279
    %v587 = vunpack.c.l.b16 %v280
    %v588 = vunpack.c.h.b16 %v280
    %v589 = vunpack.c.l.b16 %v281
    %v590 = vunpack.c.h.b16 %v281
    %v591 = vunpack.c.l.b16 %v282
    %v592 = vunpack.c.h.b16 %v282
    %v593 = vunpack.c.l.b16 %v283
    %v594 = vunpack.c.h.b16 %v283
    %v595 = vunpack.c.l.b16 %v284
    %v596 = vunpack.c.h.b16 %v284
    %v597 = vunpack.c.l.b16 %v285
    %v598 = vunpack.c.h.b16 %v285
    %v599 = vunpack.c.l.b16 %v286
    %v600 = vunpack.c.h.b16 %v286
    %v601 = vunpack.c.l.b16 %v287
    %v602 = vunpack.c.h.b16 %v287
    %v603 = vunpack.c.l.b16 %v288
    %v604 = vunpack.c.h.b16 %v288
    %v605 = vunpack.c.l.b16 %v289
    %v606 = vunpack.c.h.b16 %v289
    %v607 = vunpack.c.l.b16 %v290
    %v608 = vunpack.c.h.b16 %v290
    %v609 = vunpack.c.l.b16 %v291
    %v610 = vunpack.c.h.b16 %v291
    %v611 = vunpack.c.l.b16 %v292
    %v612 = vunpack.c.h.b16 %v292
    %v613 = vunpack.c.l.b16 %v293
    %v614 = vunpack.c.h.b16 %v293
    %v615 = vunpack.c.l.b16 %v294
    %v616 = vunpack.c.h.b16 %v294
    %v617 = vunpack.c.l.b16 %v295
    %v618 = vunpack.c.h.b16 %v295
    %v619 = vunpack.c.l.b16 %v296
    %v620 = vunpack.c.h.b16 %v296
    %v621 = vunpack.c.l.b16 %v297
    %v622 = vunpack.c.h.b16 %v297
    %v623 = vunpack.c.l.b16 %v298
    %v624 = vunpack.c.h.b16 %v298
    %v625 = vunpack.c.l.b16 %v299
    %v626 = vunpack.c.h.b16 %v299
    %v627 = vunpack.c.l.b16 %v300
    %v628 = vunpack.c.h.b16 %v300
    %v629 = vunpack.c.l.b16 %v301
    %v630 = vunpack.c.h.b16 %v301
    %v631 = vunpack.c.l.b16 %v302
    %v632 = vunpack.c.h.b16 %v302
    %v633 = vunpack.c.l.b16 %v303
    %v634 = vunpack.c.h.b16 %v303
    %v635 = vunpack.c.l.b16 %v304
    %v636 = vunpack.c.h.b16 %v304
    %v637 = vunpack.c.l.b16 %v305
    %v638 = vunpack.c.h.b16 %v305
    %v639 = vunpack.c.l.b16 %v306
    %v640 = vunpack.c.h.b16 %v306
    %v641 = vunpack.c.l.b16 %v307
    %v642 = vunpack.c.h.b16 %v307
    %v643 = vunpack.c.l.b16 %v308
    %v644 = vunpack.c.h.b16 %v308
    %v645 = vunpack.c.l.b16 %v309
    %v646 = vunpack.c.h.b16 %v309
    %v647 = vunpack.c.l.b16 %v310
    %v648 = vunpack.c.h.b16 %v310
    %v649 = vunpack.c.l.b16 %v311
    %v650 = vunpack.c.h.b16 %v311
    %v651 = vunpack.c.l.b16 %v312
    %v652 = vunpack.c.h.b16 %v312
    %v653 = vunpack.c.l.b16 %v313
    %v654 = vunpack.c.h.b16 %v313
    %v655 = vunpack.c.l.b16 %v314
    %v656 = vunpack.c.h.b16 %v314
    %v657 = vunpack.c.l.b16 %v315
    %v658 = vunpack.c.h.b16 %v315
    %v659 = vunpack.c.l.b16 %v316
    %v660 = vunpack.c.h.b16 %v316
    %v661 = vunpack.c.l.b16 %v317
    %v662 = vunpack.c.h.b16 %v317
    %v663 = vunpack.c.l.b16 %v318
    %v664 = vunpack.c.h.b16 %v318
    %v665 = vunpack.c.l.b16 %v319
    %v666 = vunpack.c.h.b16 %v319
    %v667 = vunpack.c.l.b16 %v320
    %v668 = vunpack.c.h.b16 %v320
    %v669 = vunpack.c.l.b16 %v321
    %v670 = vunpack.c.h.b16 %v321
    %v671 = vunpack.c.l.b16 %v322
    %v672 = vunpack.c.h.b16 %v322
    %v673 = vunpack.c.l.b16 %v323
    %v674 = vunpack.c.h.b16 %v323
    %v675 = vunpack.c.l.b16 %v324
    %v676 = vunpack.c.h.b16 %v324
    %v677 = vunpack.c.l.b16 %v325
    %v678 = vunpack.c.h.b16 %v325
    %v679 = vunpack.c.l.b16 %v326
    %v680 = vunpack.c.h.b16 %v326
    %v681 = vunpack.c.l.b16 %v327
    %v682 = vunpack.c.h.b16 %v327
    %v683 = vunpack.c.l.b16 %v328
    %v684 = vunpack.c.h.b16 %v328
    %v685 = vunpack.c.l.b16 %v329
    %v686 = vunpack.c.h.b16 %v329
    %v687 = vunpack.c.l.b16 %v330
    %v688 = vunpack.c.h.b16 %v330
    %v689 = vunpack.c.l.b16 %v331
    %v690 = vunpack.c.h.b16 %v331
    %v691 = vunpack.c.l.b16 %v332
    %v692 = vunpack.c.h.b16 %v332
    %v693 = vunpack.c.l.b16 %v333
    %v694 = vunpack.c.h.b16 %v333
    %v695 = vunpack.c.l.b16 %v334
    %v696 = vunpack.c.h.b16 %v334
    %v697 = vunpack.c.l.b16 %v335
    %v698 = vunpack.c.h.b16 %v335
    %v699 = vunpack.c.l.b16 %v336
    %v700 = vunpack.c.h.b16 %v336
    %v701 = vunpack.c.l.b16 %v337
    %v702 = vunpack.c.h.b16 %v337
    %v703 = vunpack.c.l.b16 %v338
    %v704 = vunpack.c.h.b16 %v338
    %v705 = vunpack.c.l.b16 %v339
    %v706 = vunpack.c.h.b16 %v339
    %v707 = vunpack.c.l.b16 %v340
    %v708 = vunpack.c.h.b16 %v340
    %v709 = vunpack.c.l.b16 %v341
    %v710 = vunpack.c.h.b16 %v341
    %v711 = vunpack.c.l.b16 %v342
    %v712 = vunpack.c.h.b16 %v342
    %v713 = vunpack.c.l.b16 %v343
    %v714 = vunpack.c.h.b16 %v343
    %v715 = vunpack.c.l.b16 %v344
    %v716 = vunpack.c.h.b16 %v344
    %v717 = vunpack.c.l.b16 %v345
    %v718 = vunpack.c.h.b16 %v345
    %v719 = vunpack.c.l.b16 %v346
    %v720 = vunpack.c.h.b16 %v346
    %v721 = vunpack.c.l.b16 %v347
    %v722 = vunpack.c.h.b16 %v347
    %v723 = vunpack.c.l.b16 %v348
    %v724 = vunpack.c.h.b16 %v348
    %v725 = vunpack.c.l.b16 %v349
    %v726 = vunpack.c.h.b16 %v349
    %v727 = vunpack.c.l.b16 %v350
    %v728 = vunpack.c.h.b16 %v350
    %v729 = vunpack.c.l.b16 %v351
    %v730 = vunpack.c.h.b16 %v351
    %v731 = vunpack.c.l.b16 %v352
    %v732 = vunpack.c.h.b16 %v352
    %v733 = vunpack.c.l.b16 %v353
    %v734 = vunpack.c.h.b16 %v353
    %v735 = vunpack.c.l.b16 %v354
    %v736 = vunpack.c.h.b16 %v354
    %v737 = vunpack.c.l.b16 %v355
    %v738 = vunpack.c.h.b16 %v355
    %v739 = vunpack.c.l.b16 %v356
    %v740 = vunpack.c.h.b16 %v356
    %v741 = vunpack.c.l.b16 %v357
    %v742 = vunpack.c.h.b16 %v357
    %v743 = vunpack.c.l.b16 %v358
    %v744 = vunpack.c.h.b16 %v358
    %v745 = vunpack.c.l.b16 %v359
    %v746 = vunpack.c.h.b16 %v359
    %v747 = vunpack.c.l.b16 %v360
    %v748 = vunpack.c.h.b16 %v360
    %v749 = vunpack.c.l.b16 %v361
    %v750 = vunpack.c.h.b16 %v361
    %v751 = vunpack.c.l.b16 %v362
    %v752 = vunpack.c.h.b16 %v362
    %v753 = vunpack.c.l.b16 %v363
    %v754 = vunpack.c.h.b16 %v363
    %v755 = vunpack.c.l.b16 %v364
    %v756 = vunpack.c.h.b16 %v364
    %v757 = vunpack.c.l.b16 %v365
    %v758 = vunpack.c.h.b16 %v365
    %v759 = vunpack.c.l.b16 %v366
    %v760 = vunpack.c.h.b16 %v366
    %v761 = vunpack.c.l.b16 %v367
    %v762 = vunpack.c.h.b16 %v367
    %v763 = vunpack.c.l.b16 %v368
    %v764 = vunpack.c.h.b16 %v368
    %v765 = vunpack.c.l.b16 %v369
    %v766 = vunpack.c.h.b16 %v369
    %v767 = vunpack.c.l.b16 %v370
    %v768 = vunpack.c.h.b16 %v370
    %v769 = vunpack.c.l.b16 %v371
    %v770 = vunpack.c.h.b16 %v371
    %v771 = vunpack.c.l.b16 %v372
    %v772 = vunpack.c.h.b16 %v372
    %v773 = vunpack.c.l.b16 %v373
    %v774 = vunpack.c.h.b16 %v373
    %v775 = vunpack.c.l.b16 %v374
    %v776 = vunpack.c.h.b16 %v374
    %v777 = vunpack.c.l.b16 %v375
    %v778 = vunpack.c.h.b16 %v375
    %v779 = vunpack.c.l.b16 %v376
    %v780 = vunpack.c.h.b16 %v376
    %v781 = vunpack.c.l.b16 %v377
    %v782 = vunpack.c.h.b16 %v377
    %v783 = vunpack.c.l.b16 %v378
    %v784 = vunpack.c.h.b16 %v378
    %v785 = vpack.c.b16 %v533, %v529
    %v786 = vpack.c.b16 %v534, %v530
    %v787 = vpack.c.b16 %v535, %v531
    %v788 = vpack.c.b16 %v536, %v532
    %v789 = vpack.c.b16 %v541, %v537
    %v790 = vpack.c.b16 %v542, %v538
    %v791 = vpack.c.b16 %v543, %v539
    %v792 = vpack.c.b16 %v544, %v540
    %v793 = vpack.c.b16 %v549, %v545
    %v794 = vpack.c.b16 %v550, %v546
    %v795 = vpack.c.b16 %v551, %v547
    %v796 = vpack.c.b16 %v552, %v548
    %v797 = vpack.c.b16 %v557, %v553
    %v798 = vpack.c.b16 %v558, %v554
    %v799 = vpack.c.b16 %v559, %v555
    %v800 = vpack.c.b16 %v560, %v556
    %v801 = vpack.c.b16 %v565, %v561
    %v802 = vpack.c.b16 %v566, %v562
    %v803 = vpack.c.b16 %v567, %v563
    %v804 = vpack.c.b16 %v568, %v564
    %v805 = vpack.c.b16 %v573, %v569
    %v806 = vpack.c.b16 %v574, %v570
    %v807 = vpack.c.b16 %v575, %v571
    %v808 = vpack.c.b16 %v576, %v572
    %v809 = vpack.c.b16 %v581, %v577
    %v810 = vpack.c.b16 %v582, %v578
    %v811 = vpack.c.b16 %v583, %v579
    %v812 = vpack.c.b16 %v584, %v580
    %v813 = vpack.c.b16 %v589, %v585
    %v814 = vpack.c.b16 %v590, %v586
    %v815 = vpack.c.b16 %v591, %v587
    %v816 = vpack.c.b16 %v592, %v588
    %v817 = vpack.c.b16 %v597, %v593
    %v818 = vpack.c.b16 %v598, %v594
    %v819 = vpack.c.b16 %v599, %v595
    %v820 = vpack.c.b16 %v600, %v596
    %v821 = vpack.c.b16 %v605, %v601
    %v822 = vpack.c.b16 %v606, %v602
    %v823 = vpack.c.b16 %v607, %v603
    %v824 = vpack.c.b16 %v608, %v604
    %v825 = vpack.c.b16 %v613, %v609
    %v826 = vpack.c.b16 %v614, %v610
    %v827 = vpack.c.b16 %v615, %v611
    %v828 = vpack.c.b16 %v616, %v612
    %v829 = vpack.c.b16 %v621, %v617
    %v830 = vpack.c.b16 %v622, %v618
    %v831 = vpack.c.b16 %v623, %v619
    %v832 = vpack.c.b16 %v624, %v620
    %v833 = vpack.c.b16 %v629, %v625
    %v834 = vpack.c.b16 %v630, %v626
    %v835 = vpack.c.b16 %v631, %v627
    %v836 = vpack.c.b16 %v632, %v628
    %v837 = vpack.c.b16 %v637, %v633
    %v838 = vpack.c.b16 %v638, %v634
    %v839 = vpack.c.b16 %v639, %v635
    %v840 = vpack.c.b16 %v640, %v636
    %v841 = vpack.c.b16 %v645, %v641
    %v842 = vpack.c.b16 %v646, %v642
    %v843 = vpack.c.b16 %v647, %v643
    %v844 = vpack.c.b16 %v648, %v644
    %v845 = vpack.c.b16 %v653, %v649
    %v846 = vpack.c.b16 %v654, %v650
    %v847 = vpack.c.b16 %v655, %v651
    %v848 = vpack.c.b16 %v656, %v652
    %v849 = vpack.c.b16 %v661, %v657
    %v850 = vpack.c.b16 %v662, %v658
    %v851 = vpack.c.b16 %v663, %v659
    %v852 = vpack.c.b16 %v664, %v660
    %v853 = vpack.c.b16 %v669, %v665
    %v854 = vpack.c.b16 %v670, %v666
    %v855 = vpack.c.b16 %v671, %v667
    %v856 = vpack.c.b16 %v672, %v668
    %v857 = vpack.c.b16 %v677, %v673
    %v858 = vpack.c.b16 %v678, %v674
    %v859 = vpack.c.b16 %v679, %v675
    %v860 = vpack.c.b16 %v680, %v676
    %v861 = vpack.c.b16 %v685, %v681
    %v862 = vpack.c.b16 %v686, %v682
    %v863 = vpack.c.b16 %v687, %v683
    %v864 = vpack.c.b16 %v688, %v684
    %v865 = vpack.c.b16 %v693, %v689
    %v866 = vpack.c.b16 %v694, %v690
    %v867 = vpack.c.b16 %v695, %v691
    %v868 = vpack.c.b16 %v696, %v692
    %v869 = vpack.c.b16 %v701, %v697
    %v870 = vpack.c.b16 %v702, %v698
    %v871 = vpack.c.b16 %v703, %v699
    %v872 = vpack.c.b16 %v704, %v700
    %v873 = vpack.c.b16 %v709, %v705
    %v874 = vpack.c.b16 %v710, %v706
    %v875 = vpack.c.b16 %v711, %v707
    %v876 = vpack.c.b16 %v712, %v708
    %v877 = vpack.c.b16 %v717, %v713
    %v878 = vpack.c.b16 %v718, %v714
    %v879 = vpack.c.b16 %v719, %v715
    %v880 = vpack.c.b16 %v720, %v716
    %v881 = vpack.c.b16 %v725, %v721
    %v882 = vpack.c.b16 %v726, %v722
    %v883 = vpack.c.b16 %v727, %v723
    %v884 = vpack.c.b16 %v728, %v724
    %v885 = vpack.c.b16 %v733, %v729
    %v886 = vpack.c.b16 %v734, %v730
    %v887 = vpack.c.b16 %v735, %v731
    %v888 = vpack.c.b16 %v736, %v732
    %v889 = vpack.c.b16 %v741, %v737
    %v890 = vpack.c.b16 %v742, %v738
    %v891 = vpack.c.b16 %v743, %v739
    %v892 = vpack.c.b16 %v744, %v740
    %v893 = vpack.c.b16 %v749, %v745
    %v894 = vpack.c.b16 %v750, %v746
    %v895 = vpack.c.b16 %v751, %v747
    %v896 = vpack.c.b16 %v752, %v748
    %v897 = vpack.c.b16 %v757, %v753
    %v898 = vpack.c.b16 %v758, %v754
    %v899 = vpack.c.b16 %v759, %v755
    %v900 = vpack.c.b16 %v760, %v756
    %v901 = vpack.c.b16 %v765, %v761
    %v902 = vpack.c.b16 %v766, %v762
    %v903 = vpack.c.b16 %v767, %v763
    %v904 = vpack.c.b16 %v768, %v764
    %v905 = vpack.c.b16 %v773, %v769
    %v906 = vpack.c.b16 %v774, %v770
    %v907 = vpack.c.b16 %v775, %v771
    %v908 = vpack.c.b16 %v776, %v772
    %v909 = vpack.c.b16 %v781, %v777
    %v910 = vpack.c.b16 %v782, %v778
    %v911 = vpack.c.b16 %v783, %v779
    %v912 = vpack.c.b16 %v784, %v780
    %1041 = vmatprep.subr.bf16.mxu0 %v814
    %1042 = vmatpush1.bf16.msra.mxu0 %v813
    %1043 = vmatprep.subr.bf16.mxu0 %v810
    %1044 = vmatpush1.bf16.msra.mxu0 %v809
    %1045 = vmatprep.subr.bf16.mxu0 %v806
    %1046 = vmatpush1.bf16.msra.mxu0 %v805
    %1047 = vmatprep.subr.bf16.mxu0 %v802
    %1048 = vmatpush1.bf16.msra.mxu0 %v801
    %1049 = vmatprep.subr.bf16.mxu0 %v798
    %1050 = vmatpush1.bf16.msra.mxu0 %v797
    %1051 = vmatprep.subr.bf16.mxu0 %v794
    %1052 = vmatpush1.bf16.msra.mxu0 %v793
    %1053 = vmatprep.subr.bf16.mxu0 %v790
    %1054 = vmatpush1.bf16.msra.mxu0 %v789
    %1055 = vmatprep.subr.bf16.mxu0 %v786
    %1056 = vmatpush1.bf16.msra.mxu0 %v785
    %1057 = vmatprep.subr.bf16.mxu0 %v846
    %1058 = vmatpush2.bf16.msra.mxu0 %v845
    %1059 = vmatprep.subr.bf16.mxu0 %v842
    %1060 = vmatpush2.bf16.msra.mxu0 %v841
    %1061 = vmatprep.subr.bf16.mxu0 %v838
    %1062 = vmatpush2.bf16.msra.mxu0 %v837
    %1063 = vmatprep.subr.bf16.mxu0 %v834
    %1064 = vmatpush2.bf16.msra.mxu0 %v833
    %1065 = vmatprep.subr.bf16.mxu0 %v830
    %1066 = vmatpush2.bf16.msra.mxu0 %v829
    %1067 = vmatprep.subr.bf16.mxu0 %v826
    %1068 = vmatpush2.bf16.msra.mxu0 %v825
    %1069 = vmatprep.subr.bf16.mxu0 %v822
    %1070 = vmatpush2.bf16.msra.mxu0 %v821
    %1071 = vmatprep.subr.bf16.mxu0 %v818
    %1072 = vmatpush2.bf16.msra.mxu0 %v817
    %1073 = vmatprep.mubr.bf16.mxu0 %v248
    %1074 = vmatmul.mubr.bf16.gmra.mxu0 %v247
    %v1075 = vpop.f32.mrf.mxu0
    %v1076 = vadd.f32 %v384, %v1075
    %v1077 = vpop.f32.mrf.mxu0
    %v1078 = vadd.f32 %v388, %v1077
    %v1079 = vpop.f32.mrf.mxu0
    %v1080 = vpop.f32.mrf.mxu0
    %1081 = vdwg.mxu0
    %1082 = vmatprep.subr.bf16.mxu0 %v878
    %1083 = vmatpush1.bf16.msra.mxu0 %v877
    %1084 = vmatprep.subr.bf16.mxu0 %v874
    %1085 = vmatpush1.bf16.msra.mxu0 %v873
    %1086 = vmatprep.subr.bf16.mxu0 %v870
    %1087 = vmatpush1.bf16.msra.mxu0 %v869
    %1088 = vmatprep.subr.bf16.mxu0 %v866
    %1089 = vmatpush1.bf16.msra.mxu0 %v865
    %1090 = vmatprep.subr.bf16.mxu0 %v862
    %1091 = vmatpush1.bf16.msra.mxu0 %v861
    %1092 = vmatprep.subr.bf16.mxu0 %v858
    %1093 = vmatpush1.bf16.msra.mxu0 %v857
    %1094 = vmatprep.subr.bf16.mxu0 %v854
    %1095 = vmatpush1.bf16.msra.mxu0 %v853
    %1096 = vmatprep.subr.bf16.mxu0 %v850
    %1097 = vmatpush1.bf16.msra.mxu0 %v849
    %1098 = vmatprep.subr.bf16.mxu0 %v910
    %1099 = vmatpush2.bf16.msra.mxu0 %v909
    %1100 = vmatprep.subr.bf16.mxu0 %v906
    %1101 = vmatpush2.bf16.msra.mxu0 %v905
    %1102 = vmatprep.subr.bf16.mxu0 %v902
    %1103 = vmatpush2.bf16.msra.mxu0 %v901
    %1104 = vmatprep.subr.bf16.mxu0 %v898
    %1105 = vmatpush2.bf16.msra.mxu0 %v897
    %1106 = vmatprep.subr.bf16.mxu0 %v894
    %1107 = vmatpush2.bf16.msra.mxu0 %v893
    %1108 = vmatprep.subr.bf16.mxu0 %v890
    %1109 = vmatpush2.bf16.msra.mxu0 %v889
    %1110 = vmatprep.subr.bf16.mxu0 %v886
    %1111 = vmatpush2.bf16.msra.mxu0 %v885
    %1112 = vmatprep.subr.bf16.mxu0 %v882
    %1113 = vmatpush2.bf16.msra.mxu0 %v881
    %1114 = vmatprep.mubr.bf16.mxu0 %v250
    %1115 = vmatmul.mubr.bf16.gmra.mxu0 %v249
    %v1116 = vpop.f32.mrf.mxu0
    %v1117 = vadd.f32 %v1076, %v1116
    %v1118 = vpop.f32.mrf.mxu0
    %v1119 = vadd.f32 %v1078, %v1118
    %v1120 = vpop.f32.mrf.mxu0
    %v1121 = vpop.f32.mrf.mxu0
    %1122 = vdwg.mxu0
    %1123 = vmatprep.subr.bf16.mxu0 %v816
    %1124 = vmatpush1.bf16.msra.mxu0 %v815
    %1125 = vmatprep.subr.bf16.mxu0 %v812
    %1126 = vmatpush1.bf16.msra.mxu0 %v811
    %1127 = vmatprep.subr.bf16.mxu0 %v808
    %1128 = vmatpush1.bf16.msra.mxu0 %v807
    %1129 = vmatprep.subr.bf16.mxu0 %v804
    %1130 = vmatpush1.bf16.msra.mxu0 %v803
    %1131 = vmatprep.subr.bf16.mxu0 %v800
    %1132 = vmatpush1.bf16.msra.mxu0 %v799
    %1133 = vmatprep.subr.bf16.mxu0 %v796
    %1134 = vmatpush1.bf16.msra.mxu0 %v795
    %1135 = vmatprep.subr.bf16.mxu0 %v792
    %1136 = vmatpush1.bf16.msra.mxu0 %v791
    %1137 = vmatprep.subr.bf16.mxu0 %v788
    %1138 = vmatpush1.bf16.msra.mxu0 %v787
    %1139 = vmatprep.subr.bf16.mxu0 %v848
    %1140 = vmatpush2.bf16.msra.mxu0 %v847
    %1141 = vmatprep.subr.bf16.mxu0 %v844
    %1142 = vmatpush2.bf16.msra.mxu0 %v843
    %1143 = vmatprep.subr.bf16.mxu0 %v840
    %1144 = vmatpush2.bf16.msra.mxu0 %v839
    %1145 = vmatprep.subr.bf16.mxu0 %v836
    %1146 = vmatpush2.bf16.msra.mxu0 %v835
    %1147 = vmatprep.subr.bf16.mxu0 %v832
    %1148 = vmatpush2.bf16.msra.mxu0 %v831
    %1149 = vmatprep.subr.bf16.mxu0 %v828
    %1150 = vmatpush2.bf16.msra.mxu0 %v827
    %1151 = vmatprep.subr.bf16.mxu0 %v824
    %1152 = vmatpush2.bf16.msra.mxu0 %v823
    %1153 = vmatprep.subr.bf16.mxu0 %v820
    %1154 = vmatpush2.bf16.msra.mxu0 %v819
    %1155 = vmatprep.mubr.bf16.mxu0 %v248
    %1156 = vmatmul.mubr.bf16.gmra.mxu0 %v247
    %v1157 = vpop.f32.mrf.mxu0
    %v1158 = vadd.f32 %v392, %v1157
    %v1159 = vpop.f32.mrf.mxu0
    %v1160 = vadd.f32 %v396, %v1159
    %v1161 = vpop.f32.mrf.mxu0
    %v1162 = vpop.f32.mrf.mxu0
    %1163 = vdwg.mxu0
    %1164 = vmatprep.subr.bf16.mxu0 %v880
    %1165 = vmatpush1.bf16.msra.mxu0 %v879
    %1166 = vmatprep.subr.bf16.mxu0 %v876
    %1167 = vmatpush1.bf16.msra.mxu0 %v875
    %1168 = vmatprep.subr.bf16.mxu0 %v872
    %1169 = vmatpush1.bf16.msra.mxu0 %v871
    %1170 = vmatprep.subr.bf16.mxu0 %v868
    %1171 = vmatpush1.bf16.msra.mxu0 %v867
    %1172 = vmatprep.subr.bf16.mxu0 %v864
    %1173 = vmatpush1.bf16.msra.mxu0 %v863
    %1174 = vmatprep.subr.bf16.mxu0 %v860
    %1175 = vmatpush1.bf16.msra.mxu0 %v859
    %1176 = vmatprep.subr.bf16.mxu0 %v856
    %1177 = vmatpush1.bf16.msra.mxu0 %v855
    %1178 = vmatprep.subr.bf16.mxu0 %v852
    %1179 = vmatpush1.bf16.msra.mxu0 %v851
    %1180 = vmatprep.subr.bf16.mxu0 %v912
    %1181 = vmatpush2.bf16.msra.mxu0 %v911
    %1182 = vmatprep.subr.bf16.mxu0 %v908
    %1183 = vmatpush2.bf16.msra.mxu0 %v907
    %1184 = vmatprep.subr.bf16.mxu0 %v904
    %1185 = vmatpush2.bf16.msra.mxu0 %v903
    %1186 = vmatprep.subr.bf16.mxu0 %v900
    %1187 = vmatpush2.bf16.msra.mxu0 %v899
    %1188 = vmatprep.subr.bf16.mxu0 %v896
    %1189 = vmatpush2.bf16.msra.mxu0 %v895
    %1190 = vmatprep.subr.bf16.mxu0 %v892
    %1191 = vmatpush2.bf16.msra.mxu0 %v891
    %1192 = vmatprep.subr.bf16.mxu0 %v888
    %1193 = vmatpush2.bf16.msra.mxu0 %v887
    %1194 = vmatprep.subr.bf16.mxu0 %v884
    %1195 = vmatpush2.bf16.msra.mxu0 %v883
    %1196 = vmatprep.mubr.bf16.mxu0 %v250
    %1197 = vmatmul.mubr.bf16.gmra.mxu0 %v249
    %v1198 = vpop.f32.mrf.mxu0
    %v1199 = vadd.f32 %v1158, %v1198
    %v1200 = vpop.f32.mrf.mxu0
    %v1201 = vadd.f32 %v1160, %v1200
    %v1202 = vpop.f32.mrf.mxu0
    %v1203 = vpop.f32.mrf.mxu0
    %1204 = vdwg.mxu0
    %v1205 = vpack.c.bf16 %v1117, %v1117
    %v1206 = vpack.c.bf16 %v1119, %v1119
    %v1207 = vpack.c.bf16 %v1199, %v1199
    %v1208 = vpack.c.bf16 %v1201, %v1201
    %v1209 = vmul.bf16 %v1205, 1045249613
    %v1210 = vmul.bf16 %v1206, 1045249613
    %v1211 = vmul.bf16 %v1207, 1045249613
    %v1212 = vmul.bf16 %v1208, 1045249613
    %v1213 = vmax.bf16 %v1205, %v1209
    %v1214 = vmax.bf16 %v1206, %v1210
    %v1215 = vmax.bf16 %v1207, %v1211
    %v1216 = vmax.bf16 %v1208, %v1212
    %v1217 = vld [vmem:[#allocation9] sm:$0xf]
    %s1218 = sld [smem:[#allocation2]]
    %v1219 = vstv %s1218
    %v1222 = vunpack.c.l.s4 1966171168
    %v1223 = vunpack.c.0.s8 %v1222
    %v1224 = vlaneseq
    %v1225 = vshrl.u32 %v1224, 7
    %v1226 = vsub.s32 %v1223, %v1225
    %v1227 = vrot.slane %v1217, %v1226
    %v1228 = vcombine.high %v1227, %v1227
    %v1230 = vunpack.c.l.s4 1966171168
    %v1231 = vunpack.c.0.s8 %v1230
    %v1232 = vlaneseq
    %v1233 = vshrl.u32 %v1232, 7
    %v1234 = vsub.s32 %v1231, %v1233
    %v1235 = vrot.slane %v1227, %v1234
    %v1237 = vunpack.c.l.s4 1966171168
    %v1238 = vunpack.c.0.s8 %v1237
    %v1239 = vlaneseq
    %v1240 = vshrl.u32 %v1239, 7
    %v1241 = vsub.s32 %v1238, %v1240
    %v1242 = vrot.slane %v1228, %v1241
    %v1243 = vcombine.high %v1235, %v1235
    %v1244 = vcombine.high %v1242, %v1242
    %1249 = vmatprep.subr.bf16.mxu0 0
    %1250 = vmatpush1.bf16.xpose.msra.mxu0 0
    %1251 = vmatprep.subr.bf16.mxu0 0
    %1252 = vmatpush1.bf16.xpose.msra.mxu0 0
    %1253 = vmatprep.subr.bf16.mxu0 0
    %1254 = vmatpush1.bf16.xpose.msra.mxu0 0
    %1255 = vmatprep.subr.bf16.mxu0 0
    %1256 = vmatpush1.bf16.xpose.msra.mxu0 0
    %1257 = vmatprep.subr.bf16.mxu0 0
    %1258 = vmatpush1.bf16.xpose.msra.mxu0 0
    %1259 = vmatprep.subr.bf16.mxu0 0
    %1260 = vmatpush1.bf16.xpose.msra.mxu0 0
    %1261 = vmatprep.subr.bf16.mxu0 0
    %1262 = vmatpush1.bf16.xpose.msra.mxu0 0
    %1263 = vmatprep.subr.bf16.mxu0 %v1214
    %1264 = vmatpush1.bf16.xpose.msra.mxu0 %v1213
    %1265 = vmatprep.subr.bf16.mxu0 0
    %1266 = vmatpush2.bf16.xpose.msra.mxu0 0
    %1267 = vmatprep.subr.bf16.mxu0 0
    %1268 = vmatpush2.bf16.xpose.msra.mxu0 0
    %1269 = vmatprep.subr.bf16.mxu0 0
    %1270 = vmatpush2.bf16.xpose.msra.mxu0 0
    %1271 = vmatprep.subr.bf16.mxu0 0
    %1272 = vmatpush2.bf16.xpose.msra.mxu0 0
    %1273 = vmatprep.subr.bf16.mxu0 0
    %1274 = vmatpush2.bf16.xpose.msra.mxu0 0
    %1275 = vmatprep.subr.bf16.mxu0 0
    %1276 = vmatpush2.bf16.xpose.msra.mxu0 0
    %1277 = vmatprep.subr.bf16.mxu0 0
    %1278 = vmatpush2.bf16.xpose.msra.mxu0 0
    %1279 = vmatprep.subr.bf16.mxu0 0
    %1280 = vmatpush2.bf16.xpose.msra.mxu0 0
    %1281 = vmatprep.mubr.bf16.mxu0 %v1242
    %1282 = vmatmul.mubr.bf16.gmra.mxu0 %v1235
    %v1283 = vpop.f32.mrf.mxu0
    %v1284 = vadd.f32 %v1219, %v1283
    %v1285 = vpop.f32.mrf.mxu0
    %v1286 = vpop.f32.mrf.mxu0
    %v1287 = vpop.f32.mrf.mxu0
    %1288 = vdwg.mxu0
    %1289 = vmatprep.subr.bf16.mxu0 0
    %1290 = vmatpush1.bf16.xpose.msra.mxu0 0
    %1291 = vmatprep.subr.bf16.mxu0 0
    %1292 = vmatpush1.bf16.xpose.msra.mxu0 0
    %1293 = vmatprep.subr.bf16.mxu0 0
    %1294 = vmatpush1.bf16.xpose.msra.mxu0 0
    %1295 = vmatprep.subr.bf16.mxu0 0
    %1296 = vmatpush1.bf16.xpose.msra.mxu0 0
    %1297 = vmatprep.subr.bf16.mxu0 0
    %1298 = vmatpush1.bf16.xpose.msra.mxu0 0
    %1299 = vmatprep.subr.bf16.mxu0 0
    %1300 = vmatpush1.bf16.xpose.msra.mxu0 0
    %1301 = vmatprep.subr.bf16.mxu0 0
    %1302 = vmatpush1.bf16.xpose.msra.mxu0 0
    %1303 = vmatprep.subr.bf16.mxu0 %v1216
    %1304 = vmatpush1.bf16.xpose.msra.mxu0 %v1215
    %1305 = vmatprep.subr.bf16.mxu0 0
    %1306 = vmatpush2.bf16.xpose.msra.mxu0 0
    %1307 = vmatprep.subr.bf16.mxu0 0
    %1308 = vmatpush2.bf16.xpose.msra.mxu0 0
    %1309 = vmatprep.subr.bf16.mxu0 0
    %1310 = vmatpush2.bf16.xpose.msra.mxu0 0
    %1311 = vmatprep.subr.bf16.mxu0 0
    %1312 = vmatpush2.bf16.xpose.msra.mxu0 0
    %1313 = vmatprep.subr.bf16.mxu0 0
    %1314 = vmatpush2.bf16.xpose.msra.mxu0 0
    %1315 = vmatprep.subr.bf16.mxu0 0
    %1316 = vmatpush2.bf16.xpose.msra.mxu0 0
    %1317 = vmatprep.subr.bf16.mxu0 0
    %1318 = vmatpush2.bf16.xpose.msra.mxu0 0
    %1319 = vmatprep.subr.bf16.mxu0 0
    %1320 = vmatpush2.bf16.xpose.msra.mxu0 0
    %1321 = vmatprep.mubr.bf16.mxu0 %v1244
    %1322 = vmatmul.mubr.bf16.gmra.mxu0 %v1243
    %v1323 = vpop.f32.mrf.mxu0
    %v1324 = vadd.f32 %v1284, %v1323
    %v1325 = vpop.f32.mrf.mxu0
    %v1326 = vpop.f32.mrf.mxu0
    %v1327 = vpop.f32.mrf.mxu0
    %1328 = vdwg.mxu0
    %vm1329 = vcmask 57344
    %1330 = vst.msk [vmem:[#allocation11] sm:$0x1] %vm1329, %v1324
    // Predicated region
    $region46: #{tpu_custom_call.1} parent=1 // pred_check
      _
    $region47: #{tpu_custom_call.1} parent=1 // pred_check_branch
      %1332 = sbr.rel (0) target = $region49
    $region48: #{tpu_custom_call.1} parent=1 // pred_region
      %s1334 = ssub.s32 16, 16
      %1335 = vsyncadd [#allocation5], %s1334
      %s1337 = sshll.u32 [#allocation11], 4
      %s1338 = int_to_ptr.vmem [resolvable:$true] %s1337
      %1340 = dma.vmem_to_hbm [thread:$0]  %s1338, 16, %s7, [#allocation5]
    $region49: #{tpu_custom_call.1} parent=1 // pred_fallthru
      _
    // Predicated region
    $region50: #{tpu_custom_call.1} parent=1 // pred_check
      _
    $region51: #{tpu_custom_call.1} parent=1 // pred_check_branch
      %1342 = sbr.rel (0) target = $region53
    $region52: #{tpu_custom_call.1} parent=1 // pred_region
      %1343 = dma.done [#allocation5], 16
    $region53: #{tpu_custom_call.1} parent=1 // pred_fallthru
      _
    %1344 = vsyncpa [#allocation4], 1
    %1345 = vsyncpa [#allocation7], 1
    %1346 = vsyncpa [#allocation10], 1
    %1347 = vsyncpa [#allocation5], 1

</llo_original>
